<compile_context>
chip_gen: v5e
topology: v5e:2x2
jax: 0.10.0
libtpu: 0.0.40
codegen_flags: <defaults>
</compile_context>

<pallas_src>
import functools

import numpy as np
import jax
import jax.numpy as jnp
from jax import lax
from jax.experimental import pallas as pl
from jax.experimental.pallas import tpu as pltpu


# ---------------------------------------------------------------------------
# Device-aware configuration helpers
# ---------------------------------------------------------------------------

def _device_kind():
    try:
        return jax.devices()[0].device_kind.lower()
    except Exception:
        return ""


@functools.lru_cache(maxsize=None)
def _mxu_lane_target():
    """Lane width that fills one MXU tile: 256 on v6e/v7x, 128 on v2..v5."""
    kind = _device_kind()
    return 256 if any(t in kind for t in ("v6", "v7", "7x")) else 128


@functools.lru_cache(maxsize=None)
def _vmem_budget_bytes():
    """~75% of physical VMEM (headroom for compiler temporaries / DMA)."""
    cap = None
    try:
        cap = int(pltpu.get_tpu_info().vmem_capacity_bytes)
    except Exception:
        cap = None
    if not cap:
        kind = _device_kind()
        cap = (64 << 20) if any(t in kind for t in ("v7", "7x")) else (128 << 20)
    return (cap * 3) // 4


def _pick_group_width(D, head_size, n_heads, target):
    """Group heads so the attention matmuls' lane width fills one MXU tile."""
    if head_size >= target:
        return head_size
    hpg = min(n_heads, max(1, target // head_size))
    while n_heads % hpg:
        hpg -= 1
    return hpg * head_size


def _pick_batch_block(B, T, D, gw, itemsize, row_target=512):
    """Fold batch elements per grid step: raise matmul M, stay inside VMEM,
    and keep >=2 grid steps when B >= 2 (pipelining / v7x megacore)."""
    budget = _vmem_budget_bytes()
    # grid-invariant footprint (worst case: double-buffered weights + mask)
    fixed = 4 * D * D * itemsize * 2 + gw * gw * 4 * 2 + (4 << 20)
    # per folded batch element: x/out blocks (double-buffered) + f32 slab +
    # f32 per-group qkv temporary
    per_b = T * D * itemsize * 4 + T * D * 4 + T * 3 * gw * 4
    avail = max(budget - fixed, per_b)
    bt = max(1, min(B, max(1, row_target // max(T, 1)), max(1, avail // per_b)))
    while B % bt:
        bt -= 1
    if B >= 2 and B // bt < 2:
        bt = max(1, bt // 2)
        while B % bt:
            bt -= 1
    return int(bt)


@functools.lru_cache(maxsize=None)
def _head_mask(group_width, head_size):
    """Block-diagonal same-head mask, built once on the host (f32)."""
    idx = np.arange(group_width)
    m = (idx[:, None] // head_size) == (idx[None, :] // head_size)
    return jnp.asarray(m.astype(np.float32))


# ---------------------------------------------------------------------------
# Kernel
# ---------------------------------------------------------------------------

def _mha_kernel(x_ref, wqkv_ref, wproj_ref, mask_ref, o_ref, attn_ref, *,
                batch_block, seq_len, embed_dim, head_size, group_width,
                compute_dtype):
    """One (Bt, T, D) batch block per grid step; every matmul runs on the MXU."""
    bt, T, D, gw = batch_block, seq_len, embed_dim, group_width
    n_groups = D // gw
    hpg = gw // head_size
    rows = bt * T
    cdt = compute_dtype

    # Merge the folded batch dim into M so the weight matmuls see Bt*T rows.
    # (Pure re-labeling when T % 8 == 0; otherwise correct but relayout-costly.)
    x2 = x_ref[...].reshape(rows, D)

    mask = mask_ref[...] if hpg > 1 else None     # hoisted constant load

    for g in range(n_groups):                     # static loop over lane groups
        woff = g * 3 * gw
        off = g * gw
        # Per-group fused qkv projection (attention scale pre-folded into the
        # Q columns; weight columns pre-grouped as [Q_g | K_g | V_g]).
        qkv_g = jnp.dot(x2, wqkv_ref[:, woff:woff + 3 * gw],
                        preferred_element_type=jnp.float32).astype(cdt)

        for b in range(bt):                       # per-sequence attention
            r0 = b * T
            q_b = qkv_g[r0:r0 + T, 0:gw]
            k_b = qkv_g[r0:r0 + T, gw:2 * gw]
            v_b = qkv_g[r0:r0 + T, 2 * gw:3 * gw]

            # No softmax in the reference => attention is associative:
            # (q @ k^T) @ v == q @ (k^T @ v); never materialize (T, T) scores.
            ktv = lax.dot_general(
                k_b, v_b, dimension_numbers=(((0,), (0,)), ((), ())),
                preferred_element_type=jnp.float32)            # (gw, gw) f32
            if mask is not None:
                # Zero cross-head blocks (adding exact zeros preserves the
                # per-head result).
                ktv = ktv * mask

            a_b = jnp.dot(q_b, ktv.astype(cdt),
                          preferred_element_type=jnp.float32)  # (T, gw) f32

            # 'b n t h -> b t (n h)' == this head-major, lane-contiguous
            # placement inside the (rows, D) f32 slab.
            attn_ref[r0:r0 + T, off:off + gw] = a_b

    # Output projection from the lane-dense (rows, D) slab.  The cast to the
    # compute dtype is the single quantization point (MXU input precision).
    out = jnp.dot(attn_ref[...].astype(cdt), wproj_ref[...],
                  preferred_element_type=jnp.float32)          # (rows, D) f32
    # attention_dropout / residual_dropout: identity (eval mode).
    o_ref[...] = out.reshape(bt, T, D).astype(o_ref.dtype)


# ---------------------------------------------------------------------------
# Weight preparation (one-time, outside the hot path)
# ---------------------------------------------------------------------------

def prepare_weights(w_qkv, w_proj, n_heads, dtype=jnp.float32, group_width=None):
    """One-time weight preprocessing.

    * transpose to (in, out) so all kernel matmuls are plain row-major MXU dots
    * regroup qkv output columns as [Q_g | K_g | V_g] per lane group so the
      kernel computes qkv per group (small live activation), with each head's
      q/k/v block lane-contiguous (PyTorch head n reads strided columns
      h*n_heads + n)
    * fold the 1/sqrt(head_size) attention scale into the Q columns
    """
    three_d, D = w_qkv.shape
    assert three_d == 3 * D and D % n_heads == 0
    head_size = D // n_heads
    gw = group_width or _pick_group_width(D, head_size, n_heads, _mxu_lane_target())
    assert D % gw == 0 and gw % head_size == 0
    scale = float(head_size) ** -0.5

    idx = np.arange(D)
    p = (idx % head_size) * n_heads + (idx // head_size)   # PyTorch col per kernel col
    blocks = []
    for g in range(D // gw):
        pg = p[g * gw:(g + 1) * gw]
        blocks += [pg, D + pg, 2 * D + pg]                 # [Q_g | K_g | V_g]
    col_perm = np.concatenate(blocks)

    out_idx = np.arange(3 * D)
    col_scale = np.where((out_idx % (3 * gw)) < gw, scale, 1.0).astype(np.float32)

    wqkv_t = w_qkv.T[:, col_perm] * jnp.asarray(col_scale)[None, :]   # (D, 3D)
    wproj_t = w_proj.T                                                # (D, D)
    return wqkv_t.astype(dtype), wproj_t.astype(dtype)


# ---------------------------------------------------------------------------
# pallas_call wrapper
# ---------------------------------------------------------------------------

@functools.partial(jax.jit, static_argnums=(4, 5, 6, 7))
def _mha_jit(x, wqkv_t, wproj_t, mask, n_heads, group_width, batch_block,
             single_buffer_weights):
    B, T, D = x.shape
    head_size = D // n_heads
    gw = group_width
    bt = batch_block
    assert B % bt == 0
    itemsize = x.dtype.itemsize

    kernel = functools.partial(
        _mha_kernel, batch_block=bt, seq_len=T, embed_dim=D,
        head_size=head_size, group_width=gw, compute_dtype=x.dtype)

    def invariant_spec(shape):
        # Grid-invariant operands: constant index_map (one-time HBM fetch);
        # single-buffer them when supported to halve their VMEM footprint.
        if single_buffer_weights:
            return pl.BlockSpec(shape, lambda b: (0,) * len(shape),
                                pipeline_mode=pl.Buffered(1))
        return pl.BlockSpec(shape, lambda b: (0,) * len(shape))

    wbuf = 1 if single_buffer_weights else 2
    est_vmem = (bt * T * D * itemsize * 4        # x + out blocks, double-buffered
                + 4 * D * D * itemsize * wbuf    # qkv + proj weights
                + gw * gw * 4 * wbuf             # same-head mask
                + bt * T * D * 4                 # f32 attention slab scratch
                + bt * T * 3 * gw * 4            # f32 per-group qkv temporary
                + (4 << 20))                     # compiler-temporary headroom
    vmem_limit = int(min(max(est_vmem, 16 << 20), _vmem_budget_bytes()))

    # qkv: 6TD^2, attention (grouped, softmax-free rewrite): 4TDgw, proj: 2TD^2
    flops = 2 * B * T * D * (4 * D + 2 * gw)
    bytes_accessed = (2 * B * T * D + 4 * D * D) * itemsize + gw * gw * 4

    return pl.pallas_call(
        kernel,
        out_shape=jax.ShapeDtypeStruct((B, T, D), x.dtype),
        grid_spec=pltpu.PrefetchScalarGridSpec(
            num_scalar_prefetch=0,
            grid=(B // bt,),
            in_specs=[
                pl.BlockSpec((bt, T, D), lambda b: (b, 0, 0)),
                invariant_spec((D, 3 * D)),
                invariant_spec((D, D)),
                invariant_spec((gw, gw)),
            ],
            out_specs=pl.BlockSpec((bt, T, D), lambda b: (b, 0, 0)),
            scratch_shapes=[pltpu.VMEM((bt * T, D), jnp.float32)],
        ),
        compiler_params=pltpu.CompilerParams(
            dimension_semantics=("parallel",),
            vmem_limit_bytes=vmem_limit,
        ),
        cost_estimate=pl.CostEstimate(
            flops=int(flops),
            transcendentals=0,
            bytes_accessed=int(bytes_accessed)),
    )(x, wqkv_t, wproj_t, mask)


_single_buffer_mode = {"value": None}   # resolved once on first call


def multi_head_attention(x, wqkv_t, wproj_t, n_heads, group_width=None):
    """x: (B, T, D); wqkv_t: (D, 3D), wproj_t: (D, D) from prepare_weights()."""
    B, T, D = x.shape
    assert D % n_heads == 0
    assert wqkv_t.shape == (D, 3 * D) and wproj_t.shape == (D, D)
    head_size = D // n_heads
    gw = group_width or _pick_group_width(D, head_size, n_heads, _mxu_lane_target())
    assert D % gw == 0 and gw % head_size == 0
    mask = _head_mask(gw, head_size)
    bt = _pick_batch_block(B, T, D, gw, x.dtype.itemsize)

    mode = _single_buffer_mode["value"]
    if mode is None:
        # Probe once: single-buffered grid-invariant weights (pl.Buffered(1));
        # fall back to default double-buffering if this build rejects it.
        try:
            out = _mha_jit(x, wqkv_t, wproj_t, mask, n_heads, gw, bt, True)
            jax.block_until_ready(out)
            _single_buffer_mode["value"] = True
            return out
        except Exception:
            _single_buffer_mode["value"] = False
            mode = False
    return _mha_jit(x, wqkv_t, wproj_t, mask, n_heads, gw, bt, mode)


# ---------------------------------------------------------------------------
# Pure-JAX reference + self-test
# ---------------------------------------------------------------------------

def reference_mha(x, w_qkv, w_proj, n_heads):
    """Pure-JAX transcription of the PyTorch forward (eval mode)."""
    B, T, D = x.shape
    hs = D // n_heads
    qkv = jnp.einsum('btd,od->bto', x, w_qkv)          # Linear, bias=False
    q, k, v = jnp.split(qkv, 3, axis=-1)

    def split_heads(z):                                 # 'b t (h n) -> b n t h'
        z = z.reshape(B, T, hs, n_heads)
        return jnp.transpose(z, (0, 3, 1, 2))

    q, k, v = map(split_heads, (q, k, v))
    s = jnp.einsum('bnth,bnsh->bnts', q, k) * (hs ** -0.5)
    a = jnp.einsum('bnts,bnsh->bnth', s, v)
    a = jnp.transpose(a, (0, 2, 1, 3)).reshape(B, T, D)  # 'b n t h -> b t (n h)'
    return jnp.einsum('btd,od->bto', a, w_proj)


if __name__ == "__main__":
    # Small config: batch=2, seq=8, embed_dim=32, num_heads=4 (head_size=8)
    B, T, D, n_heads = 2, 8, 32, 4

    key = jax.random.PRNGKey(0)
    kx, kq, kp = jax.random.split(key, 3)
    x = jax.random.normal(kx, (B, T, D), dtype=jnp.float32)
    w_qkv = jax.random.normal(kq, (3 * D, D), dtype=jnp.float32) * 0.05   # PyTorch (out, in)
    w_proj = jax.random.normal(kp, (D, D), dtype=jnp.float32) * 0.05      # PyTorch (out, in)

    ref = reference_mha(x, w_qkv, w_proj, n_heads)

    # f32 path: strict check against the pure-JAX reference.
    wqkv_t32, wproj_t32 = prepare_weights(w_qkv, w_proj, n_heads, jnp.float32)
    out32 = jax.block_until_ready(
        multi_head_attention(x, wqkv_t32, wproj_t32, n_heads))
    assert out32.shape == (B, T, D)
    assert jnp.allclose(out32, ref, atol=1e-4, rtol=1e-4), "f32 mismatch vs reference"

    # bf16 path (recommended production config): bf16 storage, f32 accumulation.
    wqkv_tbf, wproj_tbf = prepare_weights(w_qkv, w_proj, n_heads, jnp.bfloat16)
    outbf = jax.block_until_ready(
        multi_head_attention(x.astype(jnp.bfloat16), wqkv_tbf, wproj_tbf, n_heads))
    assert outbf.shape == (B, T, D) and outbf.dtype == jnp.bfloat16
    assert float(jnp.max(jnp.abs(outbf.astype(jnp.float32) - ref))) < 2e-2, \
        "bf16 deviates too far from reference"

    # Multi-group config (exercises the grouped qkv weight layout and the
    # >1 lane-group-per-step path): D=256, 8 heads of 32, forced gw=128.
    B2, T2, D2, nh2, gw2 = 2, 8, 256, 8, 128
    k2 = jax.random.PRNGKey(1)
    kx2, kq2, kp2 = jax.random.split(k2, 3)
    x2 = jax.random.normal(kx2, (B2, T2, D2), dtype=jnp.float32)
    w_qkv2 = jax.random.normal(kq2, (3 * D2, D2), dtype=jnp.float32) * 0.02
    w_proj2 = jax.random.normal(kp2, (D2, D2), dtype=jnp.float32) * 0.02
    ref2 = reference_mha(x2, w_qkv2, w_proj2, nh2)
    wq2, wp2 = prepare_weights(w_qkv2, w_proj2, nh2, jnp.float32, group_width=gw2)
    out2 = jax.block_until_ready(
        multi_head_attention(x2, wq2, wp2, nh2, group_width=gw2))
    assert jnp.allclose(out2, ref2, atol=1e-4, rtol=1e-4), "multi-group f32 mismatch"

    print("KERNEL_OK")
</pallas_src>

<mosaic_0001>
module attributes {stable_mosaic.version = 11 : i64} {
  func.func @_mha_kernel(%arg0: i32, %arg1: memref<1x8x32xf32, #tpu.memory_space<vmem>>, %arg2: memref<32x96xf32, #tpu.memory_space<vmem>>, %arg3: memref<32x32xf32, #tpu.memory_space<vmem>>, %arg4: memref<32x32xf32, #tpu.memory_space<vmem>>, %arg5: memref<1x8x32xf32, #tpu.memory_space<vmem>>, %arg6: memref<8x32xf32, #tpu.memory_space<vmem>>) attributes {dimension_semantics = [#tpu.dimension_semantics<parallel>], iteration_bounds = array<i64: 2>, scalar_prefetch = 0 : i64, scratch_operands = 1 : i64, tpu.core_type = #tpu.core_type<tc>, window_params = [{transform_indices = @transform_0, window_bounds = array<i64: 1, 8, 32>}, {pipeline_mode = #tpu.pipeline_mode<synchronous>, transform_indices = @transform_1, window_bounds = array<i64: 32, 96>}, {pipeline_mode = #tpu.pipeline_mode<synchronous>, transform_indices = @transform_2, window_bounds = array<i64: 32, 32>}, {pipeline_mode = #tpu.pipeline_mode<synchronous>, transform_indices = @transform_3, window_bounds = array<i64: 32, 32>}, {transform_indices = @transform_4, window_bounds = array<i64: 1, 8, 32>}]} {
    %c0 = arith.constant 0 : index
    %c0_0 = arith.constant 0 : index
    %c0_1 = arith.constant 0 : index
    %0 = vector.load %arg1[%c0, %c0_0, %c0_1] : memref<1x8x32xf32, #tpu.memory_space<vmem>>, vector<1x8x32xf32>
    %1 = vector.shape_cast %0 : vector<1x8x32xf32> to vector<8x32xf32>
    %c0_2 = arith.constant 0 : index
    %c0_3 = arith.constant 0 : index
    %2 = vector.load %arg4[%c0_2, %c0_3] : memref<32x32xf32, #tpu.memory_space<vmem>>, vector<32x32xf32>
    %c0_4 = arith.constant 0 : index
    %c0_5 = arith.constant 0 : index
    %3 = vector.load %arg2[%c0_4, %c0_5] : memref<32x96xf32, #tpu.memory_space<vmem>>, vector<32x96xf32>
    %cst = arith.constant dense<0.000000e+00> : vector<8x96xf32>
    %4 = tpu.matmul %1, %3, %cst {dimension_numbers = #tpu.dot_dimension_numbers<[1], [0], [0], [1], [0, 0, 1, 1], [], []>} : vector<8x32xf32>, vector<32x96xf32>, vector<8x96xf32> -> vector<8x96xf32>
    %5 = vector.extract_strided_slice %4 {offsets = [0, 0], sizes = [8, 32], strides = [1, 1]} : vector<8x96xf32> to vector<8x32xf32>
    %6 = vector.extract_strided_slice %4 {offsets = [0, 32], sizes = [8, 32], strides = [1, 1]} : vector<8x96xf32> to vector<8x32xf32>
    %7 = vector.extract_strided_slice %4 {offsets = [0, 64], sizes = [8, 32], strides = [1, 1]} : vector<8x96xf32> to vector<8x32xf32>
    %cst_6 = arith.constant dense<0.000000e+00> : vector<32x32xf32>
    %8 = tpu.matmul %6, %7, %cst_6 {dimension_numbers = #tpu.dot_dimension_numbers<[0], [0], [1], [1], [0, 1, 1, 1], [], []>} : vector<8x32xf32>, vector<8x32xf32>, vector<32x32xf32> -> vector<32x32xf32>
    %9 = arith.mulf %8, %2 : vector<32x32xf32>
    %cst_7 = arith.constant dense<0.000000e+00> : vector<8x32xf32>
    %10 = tpu.matmul %5, %9, %cst_7 {dimension_numbers = #tpu.dot_dimension_numbers<[1], [0], [0], [1], [0, 0, 1, 1], [], []>} : vector<8x32xf32>, vector<32x32xf32>, vector<8x32xf32> -> vector<8x32xf32>
    %c0_8 = arith.constant 0 : index
    %c0_9 = arith.constant 0 : index
    %11 = vector.load %arg6[%c0_8, %c0_9] : memref<8x32xf32, #tpu.memory_space<vmem>>, vector<8x32xf32>
    tpu.vector_store %arg6[%c0_8, %c0_9], %10 {strides = array<i32>} : memref<8x32xf32, #tpu.memory_space<vmem>>, vector<8x32xf32>,
    %c0_10 = arith.constant 0 : index
    %c0_11 = arith.constant 0 : index
    %12 = vector.load %arg6[%c0_10, %c0_11] : memref<8x32xf32, #tpu.memory_space<vmem>>, vector<8x32xf32>
    %c0_12 = arith.constant 0 : index
    %c0_13 = arith.constant 0 : index
    %13 = vector.load %arg3[%c0_12, %c0_13] : memref<32x32xf32, #tpu.memory_space<vmem>>, vector<32x32xf32>
    %cst_14 = arith.constant dense<0.000000e+00> : vector<8x32xf32>
    %14 = tpu.matmul %12, %13, %cst_14 {dimension_numbers = #tpu.dot_dimension_numbers<[1], [0], [0], [1], [0, 0, 1, 1], [], []>} : vector<8x32xf32>, vector<32x32xf32>, vector<8x32xf32> -> vector<8x32xf32>
    %15 = vector.shape_cast %14 : vector<8x32xf32> to vector<1x8x32xf32>
    %c0_15 = arith.constant 0 : index
    %c0_16 = arith.constant 0 : index
    %c0_17 = arith.constant 0 : index
    %16 = vector.load %arg5[%c0_15, %c0_16, %c0_17] : memref<1x8x32xf32, #tpu.memory_space<vmem>>, vector<1x8x32xf32>
    tpu.vector_store %arg5[%c0_15, %c0_16, %c0_17], %15 {strides = array<i32>} : memref<1x8x32xf32, #tpu.memory_space<vmem>>, vector<1x8x32xf32>,
    return
  }
  func.func @transform_0(%arg0: i32) -> (i32, i32, i32) {
    %c0_i32 = arith.constant 0 : i32
    %c0_i32_0 = arith.constant 0 : i32
    %c0_i32_1 = arith.constant 0 : i32
    return %arg0, %c0_i32, %c0_i32_0 : i32, i32, i32
  }
  func.func @transform_1(%arg0: i32) -> (i32, i32) {
    %c0_i32 = arith.constant 0 : i32
    %c0_i32_0 = arith.constant 0 : i32
    %c0_i32_1 = arith.constant 0 : i32
    return %c0_i32, %c0_i32_0 : i32, i32
  }
  func.func @transform_2(%arg0: i32) -> (i32, i32) {
    %c0_i32 = arith.constant 0 : i32
    %c0_i32_0 = arith.constant 0 : i32
    %c0_i32_1 = arith.constant 0 : i32
    return %c0_i32, %c0_i32_0 : i32, i32
  }
  func.func @transform_3(%arg0: i32) -> (i32, i32) {
    %c0_i32 = arith.constant 0 : i32
    %c0_i32_0 = arith.constant 0 : i32
    %c0_i32_1 = arith.constant 0 : i32
    return %c0_i32, %c0_i32_0 : i32, i32
  }
  func.func @transform_4(%arg0: i32) -> (i32, i32, i32) {
    %c0_i32 = arith.constant 0 : i32
    %c0_i32_0 = arith.constant 0 : i32
    %c0_i32_1 = arith.constant 0 : i32
    return %arg0, %c0_i32, %c0_i32_0 : i32, i32, i32
  }
}

module attributes {stable_mosaic.version = 11 : i64} {
  func.func @_mha_kernel(%arg0: i32, %arg1: memref<1x8x32xf32, #tpu.memory_space<vmem>>, %arg2: memref<32x96xf32, #tpu.memory_space<vmem>>, %arg3: memref<32x32xf32, #tpu.memory_space<vmem>>, %arg4: memref<32x32xf32, #tpu.memory_space<vmem>>, %arg5: memref<1x8x32xf32, #tpu.memory_space<vmem>>, %arg6: memref<8x32xf32, #tpu.memory_space<vmem>>) attributes {dimension_semantics = [#tpu.dimension_semantics<parallel>], iteration_bounds = array<i64: 2>, scalar_prefetch = 0 : i64, scratch_operands = 1 : i64, tpu.core_type = #tpu.core_type<tc>, window_params = [{transform_indices = @transform_0, window_bounds = array<i64: 1, 8, 32>}, {pipeline_mode = #tpu.pipeline_mode<synchronous>, transform_indices = @transform_1, window_bounds = array<i64: 32, 96>}, {pipeline_mode = #tpu.pipeline_mode<synchronous>, transform_indices = @transform_2, window_bounds = array<i64: 32, 32>}, {pipeline_mode = #tpu.pipeline_mode<synchronous>, transform_indices = @transform_3, window_bounds = array<i64: 32, 32>}, {transform_indices = @transform_4, window_bounds = array<i64: 1, 8, 32>}]} {
    %c0 = arith.constant 0 : index
    %c0_0 = arith.constant 0 : index
    %c0_1 = arith.constant 0 : index
    %0 = vector.load %arg1[%c0, %c0_0, %c0_1] : memref<1x8x32xf32, #tpu.memory_space<vmem>>, vector<1x8x32xf32>
    %1 = vector.shape_cast %0 : vector<1x8x32xf32> to vector<8x32xf32>
    %c0_2 = arith.constant 0 : index
    %c0_3 = arith.constant 0 : index
    %2 = vector.load %arg4[%c0_2, %c0_3] : memref<32x32xf32, #tpu.memory_space<vmem>>, vector<32x32xf32>
    %c0_4 = arith.constant 0 : index
    %c0_5 = arith.constant 0 : index
    %3 = vector.load %arg2[%c0_4, %c0_5] : memref<32x96xf32, #tpu.memory_space<vmem>>, vector<32x96xf32>
    %cst = arith.constant dense<0.000000e+00> : vector<8x96xf32>
    %4 = tpu.matmul %1, %3, %cst {dimension_numbers = #tpu.dot_dimension_numbers<[1], [0], [0], [1], [0, 0, 1, 1], [], []>} : vector<8x32xf32>, vector<32x96xf32>, vector<8x96xf32> -> vector<8x96xf32>
    %5 = vector.extract_strided_slice %4 {offsets = [0, 0], sizes = [8, 32], strides = [1, 1]} : vector<8x96xf32> to vector<8x32xf32>
    %6 = vector.extract_strided_slice %4 {offsets = [0, 32], sizes = [8, 32], strides = [1, 1]} : vector<8x96xf32> to vector<8x32xf32>
    %7 = vector.extract_strided_slice %4 {offsets = [0, 64], sizes = [8, 32], strides = [1, 1]} : vector<8x96xf32> to vector<8x32xf32>
    %cst_6 = arith.constant dense<0.000000e+00> : vector<32x32xf32>
    %8 = tpu.matmul %6, %7, %cst_6 {dimension_numbers = #tpu.dot_dimension_numbers<[0], [0], [1], [1], [0, 1, 1, 1], [], []>} : vector<8x32xf32>, vector<8x32xf32>, vector<32x32xf32> -> vector<32x32xf32>
    %9 = arith.mulf %8, %2 : vector<32x32xf32>
    %cst_7 = arith.constant dense<0.000000e+00> : vector<8x32xf32>
    %10 = tpu.matmul %5, %9, %cst_7 {dimension_numbers = #tpu.dot_dimension_numbers<[1], [0], [0], [1], [0, 0, 1, 1], [], []>} : vector<8x32xf32>, vector<32x32xf32>, vector<8x32xf32> -> vector<8x32xf32>
    %c0_8 = arith.constant 0 : index
    %c0_9 = arith.constant 0 : index
    %11 = vector.load %arg6[%c0_8, %c0_9] : memref<8x32xf32, #tpu.memory_space<vmem>>, vector<8x32xf32>
    tpu.vector_store %arg6[%c0_8, %c0_9], %10 {strides = array<i32>} : memref<8x32xf32, #tpu.memory_space<vmem>>, vector<8x32xf32>,
    %c0_10 = arith.constant 0 : index
    %c0_11 = arith.constant 0 : index
    %12 = vector.load %arg6[%c0_10, %c0_11] : memref<8x32xf32, #tpu.memory_space<vmem>>, vector<8x32xf32>
    %c0_12 = arith.constant 0 : index
    %c0_13 = arith.constant 0 : index
    %13 = vector.load %arg3[%c0_12, %c0_13] : memref<32x32xf32, #tpu.memory_space<vmem>>, vector<32x32xf32>
    %cst_14 = arith.constant dense<0.000000e+00> : vector<8x32xf32>
    %14 = tpu.matmul %12, %13, %cst_14 {dimension_numbers = #tpu.dot_dimension_numbers<[1], [0], [0], [1], [0, 0, 1, 1], [], []>} : vector<8x32xf32>, vector<32x32xf32>, vector<8x32xf32> -> vector<8x32xf32>
    %15 = vector.shape_cast %14 : vector<8x32xf32> to vector<1x8x32xf32>
    %c0_15 = arith.constant 0 : index
    %c0_16 = arith.constant 0 : index
    %c0_17 = arith.constant 0 : index
    %16 = vector.load %arg5[%c0_15, %c0_16, %c0_17] : memref<1x8x32xf32, #tpu.memory_space<vmem>>, vector<1x8x32xf32>
    tpu.vector_store %arg5[%c0_15, %c0_16, %c0_17], %15 {strides = array<i32>} : memref<1x8x32xf32, #tpu.memory_space<vmem>>, vector<1x8x32xf32>,
    return
  }
  func.func @transform_0(%arg0: i32) -> (i32, i32, i32) {
    %c0_i32 = arith.constant 0 : i32
    %c0_i32_0 = arith.constant 0 : i32
    %c0_i32_1 = arith.constant 0 : i32
    return %arg0, %c0_i32, %c0_i32_0 : i32, i32, i32
  }
  func.func @transform_1(%arg0: i32) -> (i32, i32) {
    %c0_i32 = arith.constant 0 : i32
    %c0_i32_0 = arith.constant 0 : i32
    %c0_i32_1 = arith.constant 0 : i32
    return %c0_i32, %c0_i32_0 : i32, i32
  }
  func.func @transform_2(%arg0: i32) -> (i32, i32) {
    %c0_i32 = arith.constant 0 : i32
    %c0_i32_0 = arith.constant 0 : i32
    %c0_i32_1 = arith.constant 0 : i32
    return %c0_i32, %c0_i32_0 : i32, i32
  }
  func.func @transform_3(%arg0: i32) -> (i32, i32) {
    %c0_i32 = arith.constant 0 : i32
    %c0_i32_0 = arith.constant 0 : i32
    %c0_i32_1 = arith.constant 0 : i32
    return %c0_i32, %c0_i32_0 : i32, i32
  }
  func.func @transform_4(%arg0: i32) -> (i32, i32, i32) {
    %c0_i32 = arith.constant 0 : i32
    %c0_i32_0 = arith.constant 0 : i32
    %c0_i32_1 = arith.constant 0 : i32
    return %arg0, %c0_i32, %c0_i32_0 : i32, i32, i32
  }
}

</mosaic_0001>

<llo_original>
// kernel: _mha_jit.1
$region0: #{_mha_jit.1}
  #allocation0 [shape = 'u32[]', space=smem, size = 0x4, offset = 0x4, fixed_abs, tag = 'smem constant byte address 0x4 - core index']
  #allocation1 [shape = 'u32[72,128]{1,0:T(1,128)}', space=vmem, size = 0x9000, scoped, tag = 'internal scratch']
  #allocation2 [shape = 'f32[8,32]{1,0:T(8,128)}', space=vmem, size = 0x1000, scoped, tag = 'scratch operand']
  %s0 = inlined_call_operand.hbm [shape: f32[2,8,32], index: 0, kind: input, shape index: {}]
  %s1 = inlined_call_operand.hbm [shape: f32[32,96], index: 1, kind: input, shape index: {}]
  %s2 = inlined_call_operand.hbm [shape: f32[32,32], index: 2, kind: input, shape index: {}]
  %s3 = inlined_call_operand.hbm [shape: f32[32,32], index: 3, kind: input, shape index: {}]
  %s4 = inlined_call_operand.hbm [shape: f32[2,8,32], index: 4, kind: output, shape index: {}]
  %s5 = sld [smem:[#allocation0]]
  $region65: #{_mha_jit.1} parent=0
    _
  %s7 = ssub.s32 1, %s5
  %s8 = scalar_select 0, %s7, %s5
  $region1: #{_mha_jit.1} parent=0
    #allocation3 [shape = 'u8[8192]{0}', space=vmem, size = 0x2000, scoped, tag = 'input window, operand 0']
    #allocation4 [shape = 's32[2]{0}', space=sflag, size = 0x8, scoped, tag = 'scoped memory for _mha_jit.1']
    #allocation5 [shape = 's32[2]{0}', space=sflag, size = 0x8, scoped, tag = 'scoped memory for _mha_jit.1']
    #allocation6 [shape = 'u8[16384]{0}', space=vmem, size = 0x4000, scoped, tag = 'input window, operand 1, single buffered']
    #allocation7 [shape = 's32[1]{0}', space=sflag, size = 0x4, scoped, tag = 'scoped memory for _mha_jit.1']
    #allocation8 [shape = 'u8[16384]{0}', space=vmem, size = 0x4000, scoped, tag = 'input window, operand 2, single buffered']
    #allocation9 [shape = 'u8[16384]{0}', space=vmem, size = 0x4000, scoped, tag = 'input window, operand 3, single buffered']
    #allocation10 [shape = 's32[1]{0}', space=sflag, size = 0x4, scoped, tag = 'scoped memory for _mha_jit.1']
    #allocation11 [shape = 'u8[8192]{0}', space=vmem, size = 0x2000, scoped, tag = 'output window, operand 0']
    %9 = vsyncpa [#allocation4], 0
    %s10 = scalar_lea.sflag [#allocation4], 1
    %11 = vsyncpa %s10, 0
    %12 = vsyncpa [#allocation7], 0
    %13 = vsyncpa [#allocation10], 0
    %14 = vsyncpa [#allocation5], 0
    %s15 = scalar_lea.sflag [#allocation5], 1
    %16 = vsyncpa %s15, 0
    loop: start=0, step=1, limit=4
    $region2: #{_mha_jit.1} parent=1 // loop_pre_header
      _
    $region3: #{_mha_jit.1} parent=1 // loop_header
      %s18 = sphi 0, %s22
      %p19 = scmp.ge.s32.totalorder %s18, 4
      %s28 = sphi 0, %s30
      %s31 = sphi 0, %s28
      %s32 = sphi 0, %s31
      %s48 = sphi 0, %s32
      %s52 = sphi 0, %s52
      %s54 = sphi 0, %s52
      %s55 = sphi 0, %s54
      %s69 = sphi 0, %s55
      %s73 = sphi 0, %s73
      %s75 = sphi 0, %s73
      %s76 = sphi 0, %s75
      %s90 = sphi 0, %s76
      %s94 = sphi 0, %s94
      %s96 = sphi 0, %s94
      %s97 = sphi 0, %s96
      %s111 = sphi 0, %s97
      %s117 = sphi 0, %s119
      %s120 = sphi 0, %s117
      %s121 = sphi 0, %s120
      %s137 = sphi 0, %s121
    $region4: #{_mha_jit.1} parent=1 // loop_header_branch
      %21 = sbr.rel (%p19) target = $region8
    $region5: #{_mha_jit.1} parent=1 // loop_body
      %s23 = ssub.s32 %s18, 1
      %s24 = ssub.s32 %s18, 2
      %s25 = sadd.s32 %s18, 1
      %s26 = ssub.s32 %s18, %s25
      %p27 = scmp.eq.s32.totalorder %s26, 0
      %s29 = sadd.s32 %s28, 1
      %s30 = scalar_select %p27, %s28, %s29
      %p33 = pneg %p27
      %p34 = scmp.eq.s32.totalorder %s18, 1
      %p35 = por %p33, %p34
      %p36 = scmp.ne.s32.totalorder %s28, %s31
      %p37 = scmp.eq.s32.totalorder %s18, 0
      %p38 = por %p36, %p37
      %p39 = scmp.ne.s32.totalorder %s28, %s31
      %p40 = scmp.eq.s32.totalorder %s23, 1
      %p41 = por %p39, %p40
      %p42 = scmp.ne.s32.totalorder %s31, %s32
      %p43 = scmp.eq.s32.totalorder %s23, 0
      %p44 = por %p42, %p43
      %p45 = scmp.ne.s32.totalorder %s31, %s32
      %p46 = scmp.eq.s32.totalorder %s24, 1
      %p47 = por %p45, %p46
      %p49 = scmp.ne.s32.totalorder %s32, %s48
      %p50 = scmp.eq.s32.totalorder %s24, 0
      %p51 = por %p49, %p50
      %s53 = sadd.s32 %s52, 1
      %p56 = scmp.eq.s32.totalorder %s18, 1
      %p57 = scmp.ne.s32.totalorder %s52, %s54
      %p58 = scmp.eq.s32.totalorder %s18, 0
      %p59 = por %p57, %p58
      %p60 = scmp.ne.s32.totalorder %s52, %s54
      %p61 = scmp.eq.s32.totalorder %s23, 1
      %p62 = por %p60, %p61
      %p63 = scmp.ne.s32.totalorder %s54, %s55
      %p64 = scmp.eq.s32.totalorder %s23, 0
      %p65 = por %p63, %p64
      %p66 = scmp.ne.s32.totalorder %s54, %s55
      %p67 = scmp.eq.s32.totalorder %s24, 1
      %p68 = por %p66, %p67
      %p70 = scmp.ne.s32.totalorder %s55, %s69
      %p71 = scmp.eq.s32.totalorder %s24, 0
      %p72 = por %p70, %p71
      %s74 = sadd.s32 %s73, 1
      %p77 = scmp.eq.s32.totalorder %s18, 1
      %p78 = scmp.ne.s32.totalorder %s73, %s75
      %p79 = scmp.eq.s32.totalorder %s18, 0
      %p80 = por %p78, %p79
      %p81 = scmp.ne.s32.totalorder %s73, %s75
      %p82 = scmp.eq.s32.totalorder %s23, 1
      %p83 = por %p81, %p82
      %p84 = scmp.ne.s32.totalorder %s75, %s76
      %p85 = scmp.eq.s32.totalorder %s23, 0
      %p86 = por %p84, %p85
      %p87 = scmp.ne.s32.totalorder %s75, %s76
      %p88 = scmp.eq.s32.totalorder %s24, 1
      %p89 = por %p87, %p88
      %p91 = scmp.ne.s32.totalorder %s76, %s90
      %p92 = scmp.eq.s32.totalorder %s24, 0
      %p93 = por %p91, %p92
      %s95 = sadd.s32 %s94, 1
      %p98 = scmp.eq.s32.totalorder %s18, 1
      %p99 = scmp.ne.s32.totalorder %s94, %s96
      %p100 = scmp.eq.s32.totalorder %s18, 0
      %p101 = por %p99, %p100
      %p102 = scmp.ne.s32.totalorder %s94, %s96
      %p103 = scmp.eq.s32.totalorder %s23, 1
      %p104 = por %p102, %p103
      %p105 = scmp.ne.s32.totalorder %s96, %s97
      %p106 = scmp.eq.s32.totalorder %s23, 0
      %p107 = por %p105, %p106
      %p108 = scmp.ne.s32.totalorder %s96, %s97
      %p109 = scmp.eq.s32.totalorder %s24, 1
      %p110 = por %p108, %p109
      %p112 = scmp.ne.s32.totalorder %s97, %s111
      %p113 = scmp.eq.s32.totalorder %s24, 0
      %p114 = por %p112, %p113
      %s115 = ssub.s32 %s18, %s25
      %p116 = scmp.eq.s32.totalorder %s115, 0
      %s118 = sadd.s32 %s117, 1
      %s119 = scalar_select %p116, %s117, %s118
      %p122 = pneg %p116
      %p123 = scmp.eq.s32.totalorder %s18, 1
      %p124 = por %p122, %p123
      %p125 = scmp.ne.s32.totalorder %s117, %s120
      %p126 = scmp.eq.s32.totalorder %s18, 0
      %p127 = por %p125, %p126
      %p128 = scmp.ne.s32.totalorder %s117, %s120
      %p129 = scmp.eq.s32.totalorder %s23, 1
      %p130 = por %p128, %p129
      %p131 = scmp.ne.s32.totalorder %s120, %s121
      %p132 = scmp.eq.s32.totalorder %s23, 0
      %p133 = por %p131, %p132
      %p134 = scmp.ne.s32.totalorder %s120, %s121
      %p135 = scmp.eq.s32.totalorder %s24, 1
      %p136 = por %p134, %p135
      %p138 = scmp.ne.s32.totalorder %s121, %s137
      %p139 = scmp.eq.s32.totalorder %s24, 0
      %p140 = por %p138, %p139
      %p141 = scmp.le.s32.totalorder 1, %s18
      %p142 = scmp.lt.s32.totalorder %s18, 3
      %p143 = pnand %p141, %p142
      %p144 = pneg %p143
      // Predicated region
      $region9: #{_mha_jit.1} parent=5 // pred_check
        _
      $region10: #{_mha_jit.1} parent=5 // pred_check_branch
        %146 = sbr.rel (%p143) target = $region12
      $region11: #{_mha_jit.1} parent=5 // pred_region
        %s147 = ssub.s32 %s18, 1
        // Predicated region
        $region13: #{_mha_jit.1} parent=11 // pred_check
          %p148 = pneg %p65
        $region14: #{_mha_jit.1} parent=11 // pred_check_branch
          %150 = sbr.rel (%p148) target = $region16
        $region15: #{_mha_jit.1} parent=11 // pred_region
          %152 = vsyncadd [#allocation7], 0
          %s153 = sshll.u32 %s1, 4
          %s154 = int_to_ptr.hbm [resolvable:$true] %s153
          %s155 = sshll.u32 [#allocation6], 4
          %s156 = int_to_ptr.vmem [resolvable:$true] %s155
          %161 = dma.hbm_to_vmem [thread:$0]  %s154, 512, %s156, [#allocation7], 128, 128, 8
        $region16: #{_mha_jit.1} parent=11 // pred_fallthru
          _
        // Predicated region
        $region17: #{_mha_jit.1} parent=11 // pred_check
          %p162 = pneg %p86
        $region18: #{_mha_jit.1} parent=11 // pred_check_branch
          %164 = sbr.rel (%p162) target = $region20
        $region19: #{_mha_jit.1} parent=11 // pred_region
          %166 = vsyncadd [#allocation7], 0
          %s167 = sshll.u32 %s2, 4
          %s168 = int_to_ptr.hbm [resolvable:$true] %s167
          %s169 = sshll.u32 [#allocation8], 4
          %s170 = int_to_ptr.vmem [resolvable:$true] %s169
          %175 = dma.hbm_to_vmem [thread:$0]  %s168, 512, %s170, [#allocation7], 128, 128, 8
        $region20: #{_mha_jit.1} parent=11 // pred_fallthru
          _
        // Predicated region
        $region21: #{_mha_jit.1} parent=11 // pred_check
          %p176 = pneg %p107
        $region22: #{_mha_jit.1} parent=11 // pred_check_branch
          %178 = sbr.rel (%p176) target = $region24
        $region23: #{_mha_jit.1} parent=11 // pred_region
          %180 = vsyncadd [#allocation10], 0
          %s181 = sshll.u32 %s3, 4
          %s182 = int_to_ptr.hbm [resolvable:$true] %s181
          %s183 = sshll.u32 [#allocation9], 4
          %s184 = int_to_ptr.vmem [resolvable:$true] %s183
          %189 = dma.hbm_to_vmem [thread:$0]  %s182, 512, %s184, [#allocation10], 128, 128, 8
        $region24: #{_mha_jit.1} parent=11 // pred_fallthru
          _
      $region12: #{_mha_jit.1} parent=5 // pred_fallthru
        _
      %p190 = scmp.lt.s32.totalorder %s18, 2
      // Predicated region
      $region25: #{_mha_jit.1} parent=5 // pred_check
        %p191 = pneg %p190
      $region26: #{_mha_jit.1} parent=5 // pred_check_branch
        %193 = sbr.rel (%p191) target = $region28
      $region27: #{_mha_jit.1} parent=5 // pred_region
        // Predicated region
        $region29: #{_mha_jit.1} parent=27 // pred_check
          %p194 = pneg %p38
        $region30: #{_mha_jit.1} parent=27 // pred_check_branch
          %196 = sbr.rel (%p194) target = $region32
        $region31: #{_mha_jit.1} parent=27 // pred_region
          %s197 = sand.u32 %s28, 1
          %s198 = scalar_lea.sflag [#allocation4], %s197
          %s199 = sand.u32 %s28, 1
          %s200 = smul.addr %s199, 8
          %s201 = scalar_lea.vmem [#allocation3], %s200
          %203 = vsyncadd %s198, 0
          %s204 = smul.addr %s18, 8
          %s205 = scalar_lea.hbm %s0, %s204
          %s207 = sshll.u32 %s205, 4
          %s208 = int_to_ptr.hbm [resolvable:$true] %s207
          %s209 = sshll.u32 %s201, 4
          %s210 = int_to_ptr.vmem [resolvable:$true] %s209
          %212 = dma.hbm_to_vmem [thread:$0]  %s208, 128, %s210, %s198
        $region32: #{_mha_jit.1} parent=27 // pred_fallthru
          _
      $region28: #{_mha_jit.1} parent=5 // pred_fallthru
        _
      %p213 = scmp.le.s32.totalorder 1, %s18
      %p214 = scmp.lt.s32.totalorder %s18, 3
      %p215 = pnand %p213, %p214
      %p216 = pneg %p215
      // Predicated region
      $region33: #{_mha_jit.1} parent=5 // pred_check
        _
      $region34: #{_mha_jit.1} parent=5 // pred_check_branch
        %218 = sbr.rel (%p215) target = $region36
      $region35: #{_mha_jit.1} parent=5 // pred_region
        %s219 = ssub.s32 %s18, 1
        %s220 = sand.u32 %s31, 1
        %s221 = scalar_lea.sflag [#allocation4], %s220
        %s222 = sand.u32 %s31, 1
        %s223 = smul.addr %s222, 8
        %s224 = scalar_lea.vmem [#allocation3], %s223
        // Predicated region
        $region37: #{_mha_jit.1} parent=35 // pred_check
          %p225 = pneg %p44
        $region38: #{_mha_jit.1} parent=35 // pred_check_branch
          %227 = sbr.rel (%p225) target = $region40
        $region39: #{_mha_jit.1} parent=35 // pred_region
          %229 = dma.done %s221, 128
        $region40: #{_mha_jit.1} parent=35 // pred_fallthru
          _
        // Predicated region
        $region41: #{_mha_jit.1} parent=35 // pred_check
          %p230 = pneg %p65
        $region42: #{_mha_jit.1} parent=35 // pred_check_branch
          %232 = sbr.rel (%p230) target = $region44
        $region43: #{_mha_jit.1} parent=35 // pred_region
          %234 = dma.done [#allocation7], 512
        $region44: #{_mha_jit.1} parent=35 // pred_fallthru
          _
        // Predicated region
        $region45: #{_mha_jit.1} parent=35 // pred_check
          %p235 = pneg %p86
        $region46: #{_mha_jit.1} parent=35 // pred_check_branch
          %237 = sbr.rel (%p235) target = $region48
        $region47: #{_mha_jit.1} parent=35 // pred_region
          %239 = dma.done [#allocation7], 512
        $region48: #{_mha_jit.1} parent=35 // pred_fallthru
          _
        // Predicated region
        $region49: #{_mha_jit.1} parent=35 // pred_check
          %p240 = pneg %p107
        $region50: #{_mha_jit.1} parent=35 // pred_check_branch
          %242 = sbr.rel (%p240) target = $region52
        $region51: #{_mha_jit.1} parent=35 // pred_region
          %244 = dma.done [#allocation10], 512
        $region52: #{_mha_jit.1} parent=35 // pred_fallthru
          _
        %s245 = sand.u32 %s31, 1
        %s246 = scalar_lea.sflag [#allocation4], %s245
        %s247 = sand.u32 %s31, 1
        %s248 = smul.addr %s247, 8
        %s249 = scalar_lea.vmem [#allocation3], %s248
        %p250 = pneg %p44
        %p251 = pneg %p41
        %p252 = pneg %p65
        %p253 = pneg %p62
        %p254 = pneg %p86
        %p255 = pneg %p83
        %p256 = pneg %p107
        %p257 = pneg %p104
        %p258 = pneg %p133
        %p259 = pneg %p130
        %s260 = sand.u32 %s120, 1
        %s261 = scalar_lea.sflag [#allocation5], %s260
        %s262 = sand.u32 %s120, 1
        %s263 = smul.addr %s262, 8
        %s264 = scalar_lea.vmem [#allocation11], %s263
        %v265 = vld [vmem:[%s224] sm:$0xff]
        %v266 = vld [vmem:[#allocation9] sm:$0xff]
        %v267 = vld [vmem:[#allocation9 + $0x8] sm:$0xff]
        %v268 = vld [vmem:[#allocation9 + $0x10] sm:$0xff]
        %v269 = vld [vmem:[#allocation9 + $0x18] sm:$0xff]
        %v270 = vld [vmem:[#allocation6] sm:$0xff]
        %v271 = vld [vmem:[#allocation6 + $0x8] sm:$0xff]
        %v272 = vld [vmem:[#allocation6 + $0x10] sm:$0xff]
        %v273 = vld [vmem:[#allocation6 + $0x18] sm:$0xff]
        %vm274 = vcmask 261120
        %v276 = vsel %vm274, %v265, 0
        %278 = vmatpush.msra.mxu0 0.0
        %279 = vmatpush.msra.mxu0 0.0
        %280 = vmatpush.msra.mxu0 0.0
        %281 = vmatpush.msra.mxu0 0.0
        %282 = vmatpush.msra.mxu0 0.0
        %283 = vmatpush.msra.mxu0 0.0
        %284 = vmatpush.msra.mxu0 0.0
        %285 = vmatpush.msra.mxu0 0.0
        %286 = vmatpush.msra.mxu0 0.0
        %287 = vmatpush.msra.mxu0 0.0
        %288 = vmatpush.msra.mxu0 0.0
        %289 = vmatpush.msra.mxu0 0.0
        %290 = vmatpush.msra.mxu0 %v273
        %291 = vmatpush.msra.mxu0 %v272
        %292 = vmatpush.msra.mxu0 %v271
        %293 = vmatpush.msra.mxu0 %v270
        %294 = vmatmul.f32.gmra.mxu0 %v276
        %v295 = vpop.f32.mrf.mxu0
        %v296 = vadd.f32 0.0, %v295
        %297 = vdwg.mxu0
        %299 = vrot.lane.b32.xlu0 %v296, 96
        %v300 = vpop.permute.xlu0 %299
        %302 = vxpose.xlu0.b32.start [1/16] %v300, 128
        %303 = vxpose.xlu0.b32.cont [2/16] 0.0, 128
        %304 = vxpose.xlu0.b32.cont [3/16] 0.0, 128
        %305 = vxpose.xlu0.b32.cont [4/16] 0.0, 128
        %306 = vxpose.xlu0.b32.cont [5/16] 0.0, 128
        %307 = vxpose.xlu0.b32.cont [6/16] 0.0, 128
        %308 = vxpose.xlu0.b32.cont [7/16] 0.0, 128
        %309 = vxpose.xlu0.b32.cont [8/16] 0.0, 128
        %310 = vxpose.xlu0.b32.cont [9/16] 0.0, 128
        %311 = vxpose.xlu0.b32.cont [10/16] 0.0, 128
        %312 = vxpose.xlu0.b32.cont [11/16] 0.0, 128
        %313 = vxpose.xlu0.b32.cont [12/16] 0.0, 128
        %314 = vxpose.xlu0.b32.cont [13/16] 0.0, 128
        %315 = vxpose.xlu0.b32.cont [14/16] 0.0, 128
        %316 = vxpose.xlu0.b32.cont [15/16] 0.0, 128
        %317 = vxpose.xlu0.b32.end [16/16] 0.0, 128
        %v318 = vpop.trf.xlu0
        %v319 = vpop.trf.xlu0
        %v320 = vpop.trf.xlu0
        %v321 = vpop.trf.xlu0
        %v322 = vpop.trf.xlu0
        %v323 = vpop.trf.xlu0
        %v324 = vpop.trf.xlu0
        %v325 = vpop.trf.xlu0
        %v326 = vpop.trf.xlu0
        %v327 = vpop.trf.xlu0
        %v328 = vpop.trf.xlu0
        %v329 = vpop.trf.xlu0
        %v330 = vpop.trf.xlu0
        %v331 = vpop.trf.xlu0
        %v332 = vpop.trf.xlu0
        %v333 = vpop.trf.xlu0
        %334 = vrot.lane.b32.xlu0 %v296, 64
        %v335 = vpop.permute.xlu0 %334
        %vm337 = vcmask 64512
        %v339 = vsel %vm337, %v318, 0
        %v342 = vsel %vm337, %v319, 0
        %v345 = vsel %vm337, %v320, 0
        %v348 = vsel %vm337, %v321, 0
        %350 = vmatpush.msra.mxu0 0.0
        %351 = vmatpush.msra.mxu0 0.0
        %352 = vmatpush.msra.mxu0 0.0
        %353 = vmatpush.msra.mxu0 0.0
        %354 = vmatpush.msra.mxu0 0.0
        %355 = vmatpush.msra.mxu0 0.0
        %356 = vmatpush.msra.mxu0 0.0
        %357 = vmatpush.msra.mxu0 0.0
        %358 = vmatpush.msra.mxu0 0.0
        %359 = vmatpush.msra.mxu0 0.0
        %360 = vmatpush.msra.mxu0 0.0
        %361 = vmatpush.msra.mxu0 0.0
        %362 = vmatpush.msra.mxu0 0.0
        %363 = vmatpush.msra.mxu0 0.0
        %364 = vmatpush.msra.mxu0 0.0
        %365 = vmatpush.msra.mxu0 %v335
        %366 = vmatmul.f32.gmra.mxu0 %v339
        %v367 = vpop.f32.mrf.mxu0
        %v368 = vadd.f32 0.0, %v367
        %369 = vmatmul.f32.gmra.mxu0 %v342
        %v370 = vpop.f32.mrf.mxu0
        %v371 = vadd.f32 0.0, %v370
        %372 = vmatmul.f32.gmra.mxu0 %v345
        %v373 = vpop.f32.mrf.mxu0
        %v374 = vadd.f32 0.0, %v373
        %375 = vmatmul.f32.gmra.mxu0 %v348
        %v376 = vpop.f32.mrf.mxu0
        %v377 = vadd.f32 0.0, %v376
        %378 = vdwg.mxu0
        %v379 = vmul.f32 %v368, %v266
        %v380 = vmul.f32 %v371, %v267
        %v381 = vmul.f32 %v374, %v268
        %v382 = vmul.f32 %v377, %v269
        %v383 = vsel %vm274, %v296, 0
        %385 = vmatpush.msra.mxu0 0.0
        %386 = vmatpush.msra.mxu0 0.0
        %387 = vmatpush.msra.mxu0 0.0
        %388 = vmatpush.msra.mxu0 0.0
        %389 = vmatpush.msra.mxu0 0.0
        %390 = vmatpush.msra.mxu0 0.0
        %391 = vmatpush.msra.mxu0 0.0
        %392 = vmatpush.msra.mxu0 0.0
        %393 = vmatpush.msra.mxu0 0.0
        %394 = vmatpush.msra.mxu0 0.0
        %395 = vmatpush.msra.mxu0 0.0
        %396 = vmatpush.msra.mxu0 0.0
        %397 = vmatpush.msra.mxu0 %v382
        %398 = vmatpush.msra.mxu0 %v381
        %399 = vmatpush.msra.mxu0 %v380
        %400 = vmatpush.msra.mxu0 %v379
        %401 = vmatmul.f32.gmra.mxu0 %v383
        %v402 = vpop.f32.mrf.mxu0
        %v403 = vadd.f32 0.0, %v402
        %404 = vdwg.mxu0
        %405 = vst.msk [vmem:[#allocation2] sm:$0xff] %vm274, %v403
        %v406 = vld [vmem:[#allocation2] sm:$0xff]
        %v407 = vld [vmem:[#allocation8] sm:$0xff]
        %v408 = vld [vmem:[#allocation8 + $0x8] sm:$0xff]
        %v409 = vld [vmem:[#allocation8 + $0x10] sm:$0xff]
        %v410 = vld [vmem:[#allocation8 + $0x18] sm:$0xff]
        %v412 = vsel %vm274, %v406, 0
        %414 = vmatpush.msra.mxu0 0.0
        %415 = vmatpush.msra.mxu0 0.0
        %416 = vmatpush.msra.mxu0 0.0
        %417 = vmatpush.msra.mxu0 0.0
        %418 = vmatpush.msra.mxu0 0.0
        %419 = vmatpush.msra.mxu0 0.0
        %420 = vmatpush.msra.mxu0 0.0
        %421 = vmatpush.msra.mxu0 0.0
        %422 = vmatpush.msra.mxu0 0.0
        %423 = vmatpush.msra.mxu0 0.0
        %424 = vmatpush.msra.mxu0 0.0
        %425 = vmatpush.msra.mxu0 0.0
        %426 = vmatpush.msra.mxu0 %v410
        %427 = vmatpush.msra.mxu0 %v409
        %428 = vmatpush.msra.mxu0 %v408
        %429 = vmatpush.msra.mxu0 %v407
        %430 = vmatmul.f32.gmra.mxu0 %v412
        %v431 = vpop.f32.mrf.mxu0
        %v432 = vadd.f32 0.0, %v431
        %433 = vdwg.mxu0
        %434 = vst.msk [vmem:[%s264] sm:$0xff] %vm274, %v432
        %s435 = sand.u32 %s120, 1
        %s436 = scalar_lea.sflag [#allocation5], %s435
        %s437 = sand.u32 %s120, 1
        %s438 = smul.addr %s437, 8
        %s439 = scalar_lea.vmem [#allocation11], %s438
        // Predicated region
        $region53: #{_mha_jit.1} parent=35 // pred_check
          %p440 = pneg %p130
        $region54: #{_mha_jit.1} parent=35 // pred_check_branch
          %442 = sbr.rel (%p440) target = $region56
        $region55: #{_mha_jit.1} parent=35 // pred_region
          %444 = vsyncadd %s436, 0
          %s445 = smul.addr %s23, 8
          %s446 = scalar_lea.hbm %s4, %s445
          %s448 = sshll.u32 %s439, 4
          %s449 = int_to_ptr.vmem [resolvable:$true] %s448
          %s450 = sshll.u32 %s446, 4
          %s451 = int_to_ptr.hbm [resolvable:$true] %s450
          %453 = dma.vmem_to_hbm [thread:$0]  %s449, 128, %s451, %s436
        $region56: #{_mha_jit.1} parent=35 // pred_fallthru
          _
      $region36: #{_mha_jit.1} parent=5 // pred_fallthru
        _
      %p454 = scmp.le.s32.totalorder 2, %s18
      // Predicated region
      $region57: #{_mha_jit.1} parent=5 // pred_check
        %p455 = pneg %p454
      $region58: #{_mha_jit.1} parent=5 // pred_check_branch
        %457 = sbr.rel (%p455) target = $region60
      $region59: #{_mha_jit.1} parent=5 // pred_region
        %s458 = ssub.s32 %s18, 2
        // Predicated region
        $region61: #{_mha_jit.1} parent=59 // pred_check
          %p459 = pneg %p136
        $region62: #{_mha_jit.1} parent=59 // pred_check_branch
          %461 = sbr.rel (%p459) target = $region64
        $region63: #{_mha_jit.1} parent=59 // pred_region
          %s462 = sand.u32 %s121, 1
          %s463 = scalar_lea.sflag [#allocation5], %s462
          %s464 = sand.u32 %s121, 1
          %s465 = smul.addr %s464, 8
          %s466 = scalar_lea.vmem [#allocation11], %s465
          %468 = dma.done %s463, 128
        $region64: #{_mha_jit.1} parent=59 // pred_fallthru
          _
      $region60: #{_mha_jit.1} parent=5 // pred_fallthru
        _
    $region6: #{_mha_jit.1} parent=1 // loop_footer
      %s22 = sadd.s32 1, %s18
    $region7: #{_mha_jit.1} parent=1 // loop_footer_branch
      %17 = sbr.rel target = $region3
    $region8: #{_mha_jit.1} parent=1 // loop_exit
      _
    %469 = vsyncpa [#allocation4], 1
    %s470 = scalar_lea.sflag [#allocation4], 1
    %471 = vsyncpa %s470, 1
    %472 = vsyncpa [#allocation7], 1
    %473 = vsyncpa [#allocation10], 1
    %474 = vsyncpa [#allocation5], 1
    %s475 = scalar_lea.sflag [#allocation5], 1
    %476 = vsyncpa %s475, 1

// kernel: _mha_jit.1
$region0: #{_mha_jit.1}
  #allocation0 [shape = 'u32[]', space=smem, size = 0x4, offset = 0x4, fixed_abs, tag = 'smem constant byte address 0x4 - core index']
  #allocation1 [shape = 'u32[72,128]{1,0:T(1,128)}', space=vmem, size = 0x9000, scoped, tag = 'internal scratch']
  #allocation2 [shape = 'f32[8,32]{1,0:T(8,128)}', space=vmem, size = 0x1000, scoped, tag = 'scratch operand']
  %s0 = inlined_call_operand.hbm [shape: f32[2,8,32], index: 0, kind: input, shape index: {}]
  %s1 = inlined_call_operand.hbm [shape: f32[32,96], index: 1, kind: input, shape index: {}]
  %s2 = inlined_call_operand.hbm [shape: f32[32,32], index: 2, kind: input, shape index: {}]
  %s3 = inlined_call_operand.hbm [shape: f32[32,32], index: 3, kind: input, shape index: {}]
  %s4 = inlined_call_operand.hbm [shape: f32[2,8,32], index: 4, kind: output, shape index: {}]
  %s5 = sld [smem:[#allocation0]]
  $region65: #{_mha_jit.1} parent=0
    _
  %s7 = ssub.s32 1, %s5
  %s8 = scalar_select 0, %s7, %s5
  $region1: #{_mha_jit.1} parent=0
    #allocation3 [shape = 'u8[8192]{0}', space=vmem, size = 0x2000, scoped, tag = 'input window, operand 0']
    #allocation4 [shape = 's32[2]{0}', space=sflag, size = 0x8, scoped, tag = 'scoped memory for _mha_jit.1']
    #allocation5 [shape = 's32[2]{0}', space=sflag, size = 0x8, scoped, tag = 'scoped memory for _mha_jit.1']
    #allocation6 [shape = 'u8[16384]{0}', space=vmem, size = 0x4000, scoped, tag = 'input window, operand 1, single buffered']
    #allocation7 [shape = 's32[1]{0}', space=sflag, size = 0x4, scoped, tag = 'scoped memory for _mha_jit.1']
    #allocation8 [shape = 'u8[16384]{0}', space=vmem, size = 0x4000, scoped, tag = 'input window, operand 2, single buffered']
    #allocation9 [shape = 'u8[16384]{0}', space=vmem, size = 0x4000, scoped, tag = 'input window, operand 3, single buffered']
    #allocation10 [shape = 's32[1]{0}', space=sflag, size = 0x4, scoped, tag = 'scoped memory for _mha_jit.1']
    #allocation11 [shape = 'u8[8192]{0}', space=vmem, size = 0x2000, scoped, tag = 'output window, operand 0']
    %9 = vsyncpa [#allocation4], 0
    %s10 = scalar_lea.sflag [#allocation4], 1
    %11 = vsyncpa %s10, 0
    %12 = vsyncpa [#allocation7], 0
    %13 = vsyncpa [#allocation10], 0
    %14 = vsyncpa [#allocation5], 0
    %s15 = scalar_lea.sflag [#allocation5], 1
    %16 = vsyncpa %s15, 0
    loop: start=0, step=1, limit=4
    $region2: #{_mha_jit.1} parent=1 // loop_pre_header
      _
    $region3: #{_mha_jit.1} parent=1 // loop_header
      %s18 = sphi 0, %s22
      %p19 = scmp.ge.s32.totalorder %s18, 4
      %s28 = sphi 0, %s30
      %s31 = sphi 0, %s28
      %s32 = sphi 0, %s31
      %s48 = sphi 0, %s32
      %s52 = sphi 0, %s52
      %s54 = sphi 0, %s52
      %s55 = sphi 0, %s54
      %s69 = sphi 0, %s55
      %s73 = sphi 0, %s73
      %s75 = sphi 0, %s73
      %s76 = sphi 0, %s75
      %s90 = sphi 0, %s76
      %s94 = sphi 0, %s94
      %s96 = sphi 0, %s94
      %s97 = sphi 0, %s96
      %s111 = sphi 0, %s97
      %s117 = sphi 0, %s119
      %s120 = sphi 0, %s117
      %s121 = sphi 0, %s120
      %s137 = sphi 0, %s121
    $region4: #{_mha_jit.1} parent=1 // loop_header_branch
      %21 = sbr.rel (%p19) target = $region8
    $region5: #{_mha_jit.1} parent=1 // loop_body
      %s23 = ssub.s32 %s18, 1
      %s24 = ssub.s32 %s18, 2
      %s25 = sadd.s32 %s18, 1
      %s26 = ssub.s32 %s18, %s25
      %p27 = scmp.eq.s32.totalorder %s26, 0
      %s29 = sadd.s32 %s28, 1
      %s30 = scalar_select %p27, %s28, %s29
      %p33 = pneg %p27
      %p34 = scmp.eq.s32.totalorder %s18, 1
      %p35 = por %p33, %p34
      %p36 = scmp.ne.s32.totalorder %s28, %s31
      %p37 = scmp.eq.s32.totalorder %s18, 0
      %p38 = por %p36, %p37
      %p39 = scmp.ne.s32.totalorder %s28, %s31
      %p40 = scmp.eq.s32.totalorder %s23, 1
      %p41 = por %p39, %p40
      %p42 = scmp.ne.s32.totalorder %s31, %s32
      %p43 = scmp.eq.s32.totalorder %s23, 0
      %p44 = por %p42, %p43
      %p45 = scmp.ne.s32.totalorder %s31, %s32
      %p46 = scmp.eq.s32.totalorder %s24, 1
      %p47 = por %p45, %p46
      %p49 = scmp.ne.s32.totalorder %s32, %s48
      %p50 = scmp.eq.s32.totalorder %s24, 0
      %p51 = por %p49, %p50
      %s53 = sadd.s32 %s52, 1
      %p56 = scmp.eq.s32.totalorder %s18, 1
      %p57 = scmp.ne.s32.totalorder %s52, %s54
      %p58 = scmp.eq.s32.totalorder %s18, 0
      %p59 = por %p57, %p58
      %p60 = scmp.ne.s32.totalorder %s52, %s54
      %p61 = scmp.eq.s32.totalorder %s23, 1
      %p62 = por %p60, %p61
      %p63 = scmp.ne.s32.totalorder %s54, %s55
      %p64 = scmp.eq.s32.totalorder %s23, 0
      %p65 = por %p63, %p64
      %p66 = scmp.ne.s32.totalorder %s54, %s55
      %p67 = scmp.eq.s32.totalorder %s24, 1
      %p68 = por %p66, %p67
      %p70 = scmp.ne.s32.totalorder %s55, %s69
      %p71 = scmp.eq.s32.totalorder %s24, 0
      %p72 = por %p70, %p71
      %s74 = sadd.s32 %s73, 1
      %p77 = scmp.eq.s32.totalorder %s18, 1
      %p78 = scmp.ne.s32.totalorder %s73, %s75
      %p79 = scmp.eq.s32.totalorder %s18, 0
      %p80 = por %p78, %p79
      %p81 = scmp.ne.s32.totalorder %s73, %s75
      %p82 = scmp.eq.s32.totalorder %s23, 1
      %p83 = por %p81, %p82
      %p84 = scmp.ne.s32.totalorder %s75, %s76
      %p85 = scmp.eq.s32.totalorder %s23, 0
      %p86 = por %p84, %p85
      %p87 = scmp.ne.s32.totalorder %s75, %s76
      %p88 = scmp.eq.s32.totalorder %s24, 1
      %p89 = por %p87, %p88
      %p91 = scmp.ne.s32.totalorder %s76, %s90
      %p92 = scmp.eq.s32.totalorder %s24, 0
      %p93 = por %p91, %p92
      %s95 = sadd.s32 %s94, 1
      %p98 = scmp.eq.s32.totalorder %s18, 1
      %p99 = scmp.ne.s32.totalorder %s94, %s96
      %p100 = scmp.eq.s32.totalorder %s18, 0
      %p101 = por %p99, %p100
      %p102 = scmp.ne.s32.totalorder %s94, %s96
      %p103 = scmp.eq.s32.totalorder %s23, 1
      %p104 = por %p102, %p103
      %p105 = scmp.ne.s32.totalorder %s96, %s97
      %p106 = scmp.eq.s32.totalorder %s23, 0
      %p107 = por %p105, %p106
      %p108 = scmp.ne.s32.totalorder %s96, %s97
      %p109 = scmp.eq.s32.totalorder %s24, 1
      %p110 = por %p108, %p109
      %p112 = scmp.ne.s32.totalorder %s97, %s111
      %p113 = scmp.eq.s32.totalorder %s24, 0
      %p114 = por %p112, %p113
      %s115 = ssub.s32 %s18, %s25
      %p116 = scmp.eq.s32.totalorder %s115, 0
      %s118 = sadd.s32 %s117, 1
      %s119 = scalar_select %p116, %s117, %s118
      %p122 = pneg %p116
      %p123 = scmp.eq.s32.totalorder %s18, 1
      %p124 = por %p122, %p123
      %p125 = scmp.ne.s32.totalorder %s117, %s120
      %p126 = scmp.eq.s32.totalorder %s18, 0
      %p127 = por %p125, %p126
      %p128 = scmp.ne.s32.totalorder %s117, %s120
      %p129 = scmp.eq.s32.totalorder %s23, 1
      %p130 = por %p128, %p129
      %p131 = scmp.ne.s32.totalorder %s120, %s121
      %p132 = scmp.eq.s32.totalorder %s23, 0
      %p133 = por %p131, %p132
      %p134 = scmp.ne.s32.totalorder %s120, %s121
      %p135 = scmp.eq.s32.totalorder %s24, 1
      %p136 = por %p134, %p135
      %p138 = scmp.ne.s32.totalorder %s121, %s137
      %p139 = scmp.eq.s32.totalorder %s24, 0
      %p140 = por %p138, %p139
      %p141 = scmp.le.s32.totalorder 1, %s18
      %p142 = scmp.lt.s32.totalorder %s18, 3
      %p143 = pnand %p141, %p142
      %p144 = pneg %p143
      // Predicated region
      $region9: #{_mha_jit.1} parent=5 // pred_check
        _
      $region10: #{_mha_jit.1} parent=5 // pred_check_branch
        %146 = sbr.rel (%p143) target = $region12
      $region11: #{_mha_jit.1} parent=5 // pred_region
        %s147 = ssub.s32 %s18, 1
        // Predicated region
        $region13: #{_mha_jit.1} parent=11 // pred_check
          %p148 = pneg %p65
        $region14: #{_mha_jit.1} parent=11 // pred_check_branch
          %150 = sbr.rel (%p148) target = $region16
        $region15: #{_mha_jit.1} parent=11 // pred_region
          %152 = vsyncadd [#allocation7], 0
          %s153 = sshll.u32 %s1, 4
          %s154 = int_to_ptr.hbm [resolvable:$true] %s153
          %s155 = sshll.u32 [#allocation6], 4
          %s156 = int_to_ptr.vmem [resolvable:$true] %s155
          %161 = dma.hbm_to_vmem [thread:$0]  %s154, 512, %s156, [#allocation7], 128, 128, 8
        $region16: #{_mha_jit.1} parent=11 // pred_fallthru
          _
        // Predicated region
        $region17: #{_mha_jit.1} parent=11 // pred_check
          %p162 = pneg %p86
        $region18: #{_mha_jit.1} parent=11 // pred_check_branch
          %164 = sbr.rel (%p162) target = $region20
        $region19: #{_mha_jit.1} parent=11 // pred_region
          %166 = vsyncadd [#allocation7], 0
          %s167 = sshll.u32 %s2, 4
          %s168 = int_to_ptr.hbm [resolvable:$true] %s167
          %s169 = sshll.u32 [#allocation8], 4
          %s170 = int_to_ptr.vmem [resolvable:$true] %s169
          %175 = dma.hbm_to_vmem [thread:$0]  %s168, 512, %s170, [#allocation7], 128, 128, 8
        $region20: #{_mha_jit.1} parent=11 // pred_fallthru
          _
        // Predicated region
        $region21: #{_mha_jit.1} parent=11 // pred_check
          %p176 = pneg %p107
        $region22: #{_mha_jit.1} parent=11 // pred_check_branch
          %178 = sbr.rel (%p176) target = $region24
        $region23: #{_mha_jit.1} parent=11 // pred_region
          %180 = vsyncadd [#allocation10], 0
          %s181 = sshll.u32 %s3, 4
          %s182 = int_to_ptr.hbm [resolvable:$true] %s181
          %s183 = sshll.u32 [#allocation9], 4
          %s184 = int_to_ptr.vmem [resolvable:$true] %s183
          %189 = dma.hbm_to_vmem [thread:$0]  %s182, 512, %s184, [#allocation10], 128, 128, 8
        $region24: #{_mha_jit.1} parent=11 // pred_fallthru
          _
      $region12: #{_mha_jit.1} parent=5 // pred_fallthru
        _
      %p190 = scmp.lt.s32.totalorder %s18, 2
      // Predicated region
      $region25: #{_mha_jit.1} parent=5 // pred_check
        %p191 = pneg %p190
      $region26: #{_mha_jit.1} parent=5 // pred_check_branch
        %193 = sbr.rel (%p191) target = $region28
      $region27: #{_mha_jit.1} parent=5 // pred_region
        // Predicated region
        $region29: #{_mha_jit.1} parent=27 // pred_check
          %p194 = pneg %p38
        $region30: #{_mha_jit.1} parent=27 // pred_check_branch
          %196 = sbr.rel (%p194) target = $region32
        $region31: #{_mha_jit.1} parent=27 // pred_region
          %s197 = sand.u32 %s28, 1
          %s198 = scalar_lea.sflag [#allocation4], %s197
          %s199 = sand.u32 %s28, 1
          %s200 = smul.addr %s199, 8
          %s201 = scalar_lea.vmem [#allocation3], %s200
          %203 = vsyncadd %s198, 0
          %s204 = smul.addr %s18, 8
          %s205 = scalar_lea.hbm %s0, %s204
          %s207 = sshll.u32 %s205, 4
          %s208 = int_to_ptr.hbm [resolvable:$true] %s207
          %s209 = sshll.u32 %s201, 4
          %s210 = int_to_ptr.vmem [resolvable:$true] %s209
          %212 = dma.hbm_to_vmem [thread:$0]  %s208, 128, %s210, %s198
        $region32: #{_mha_jit.1} parent=27 // pred_fallthru
          _
      $region28: #{_mha_jit.1} parent=5 // pred_fallthru
        _
      %p213 = scmp.le.s32.totalorder 1, %s18
      %p214 = scmp.lt.s32.totalorder %s18, 3
      %p215 = pnand %p213, %p214
      %p216 = pneg %p215
      // Predicated region
      $region33: #{_mha_jit.1} parent=5 // pred_check
        _
      $region34: #{_mha_jit.1} parent=5 // pred_check_branch
        %218 = sbr.rel (%p215) target = $region36
      $region35: #{_mha_jit.1} parent=5 // pred_region
        %s219 = ssub.s32 %s18, 1
        %s220 = sand.u32 %s31, 1
        %s221 = scalar_lea.sflag [#allocation4], %s220
        %s222 = sand.u32 %s31, 1
        %s223 = smul.addr %s222, 8
        %s224 = scalar_lea.vmem [#allocation3], %s223
        // Predicated region
        $region37: #{_mha_jit.1} parent=35 // pred_check
          %p225 = pneg %p44
        $region38: #{_mha_jit.1} parent=35 // pred_check_branch
          %227 = sbr.rel (%p225) target = $region40
        $region39: #{_mha_jit.1} parent=35 // pred_region
          %229 = dma.done %s221, 128
        $region40: #{_mha_jit.1} parent=35 // pred_fallthru
          _
        // Predicated region
        $region41: #{_mha_jit.1} parent=35 // pred_check
          %p230 = pneg %p65
        $region42: #{_mha_jit.1} parent=35 // pred_check_branch
          %232 = sbr.rel (%p230) target = $region44
        $region43: #{_mha_jit.1} parent=35 // pred_region
          %234 = dma.done [#allocation7], 512
        $region44: #{_mha_jit.1} parent=35 // pred_fallthru
          _
        // Predicated region
        $region45: #{_mha_jit.1} parent=35 // pred_check
          %p235 = pneg %p86
        $region46: #{_mha_jit.1} parent=35 // pred_check_branch
          %237 = sbr.rel (%p235) target = $region48
        $region47: #{_mha_jit.1} parent=35 // pred_region
          %239 = dma.done [#allocation7], 512
        $region48: #{_mha_jit.1} parent=35 // pred_fallthru
          _
        // Predicated region
        $region49: #{_mha_jit.1} parent=35 // pred_check
          %p240 = pneg %p107
        $region50: #{_mha_jit.1} parent=35 // pred_check_branch
          %242 = sbr.rel (%p240) target = $region52
        $region51: #{_mha_jit.1} parent=35 // pred_region
          %244 = dma.done [#allocation10], 512
        $region52: #{_mha_jit.1} parent=35 // pred_fallthru
          _
        %s245 = sand.u32 %s31, 1
        %s246 = scalar_lea.sflag [#allocation4], %s245
        %s247 = sand.u32 %s31, 1
        %s248 = smul.addr %s247, 8
        %s249 = scalar_lea.vmem [#allocation3], %s248
        %p250 = pneg %p44
        %p251 = pneg %p41
        %p252 = pneg %p65
        %p253 = pneg %p62
        %p254 = pneg %p86
        %p255 = pneg %p83
        %p256 = pneg %p107
        %p257 = pneg %p104
        %p258 = pneg %p133
        %p259 = pneg %p130
        %s260 = sand.u32 %s120, 1
        %s261 = scalar_lea.sflag [#allocation5], %s260
        %s262 = sand.u32 %s120, 1
        %s263 = smul.addr %s262, 8
        %s264 = scalar_lea.vmem [#allocation11], %s263
        %v265 = vld [vmem:[%s224] sm:$0xff]
        %v266 = vld [vmem:[#allocation9] sm:$0xff]
        %v267 = vld [vmem:[#allocation9 + $0x8] sm:$0xff]
        %v268 = vld [vmem:[#allocation9 + $0x10] sm:$0xff]
        %v269 = vld [vmem:[#allocation9 + $0x18] sm:$0xff]
        %v270 = vld [vmem:[#allocation6] sm:$0xff]
        %v271 = vld [vmem:[#allocation6 + $0x8] sm:$0xff]
        %v272 = vld [vmem:[#allocation6 + $0x10] sm:$0xff]
        %v273 = vld [vmem:[#allocation6 + $0x18] sm:$0xff]
        %vm274 = vcmask 261120
        %v276 = vsel %vm274, %v265, 0
        %278 = vmatpush.msra.mxu0 0.0
        %279 = vmatpush.msra.mxu0 0.0
        %280 = vmatpush.msra.mxu0 0.0
        %281 = vmatpush.msra.mxu0 0.0
        %282 = vmatpush.msra.mxu0 0.0
        %283 = vmatpush.msra.mxu0 0.0
        %284 = vmatpush.msra.mxu0 0.0
        %285 = vmatpush.msra.mxu0 0.0
        %286 = vmatpush.msra.mxu0 0.0
        %287 = vmatpush.msra.mxu0 0.0
        %288 = vmatpush.msra.mxu0 0.0
        %289 = vmatpush.msra.mxu0 0.0
        %290 = vmatpush.msra.mxu0 %v273
        %291 = vmatpush.msra.mxu0 %v272
        %292 = vmatpush.msra.mxu0 %v271
        %293 = vmatpush.msra.mxu0 %v270
        %294 = vmatmul.f32.gmra.mxu0 %v276
        %v295 = vpop.f32.mrf.mxu0
        %v296 = vadd.f32 0.0, %v295
        %297 = vdwg.mxu0
        %299 = vrot.lane.b32.xlu0 %v296, 96
        %v300 = vpop.permute.xlu0 %299
        %302 = vxpose.xlu0.b32.start [1/16] %v300, 128
        %303 = vxpose.xlu0.b32.cont [2/16] 0.0, 128
        %304 = vxpose.xlu0.b32.cont [3/16] 0.0, 128
        %305 = vxpose.xlu0.b32.cont [4/16] 0.0, 128
        %306 = vxpose.xlu0.b32.cont [5/16] 0.0, 128
        %307 = vxpose.xlu0.b32.cont [6/16] 0.0, 128
        %308 = vxpose.xlu0.b32.cont [7/16] 0.0, 128
        %309 = vxpose.xlu0.b32.cont [8/16] 0.0, 128
        %310 = vxpose.xlu0.b32.cont [9/16] 0.0, 128
        %311 = vxpose.xlu0.b32.cont [10/16] 0.0, 128
        %312 = vxpose.xlu0.b32.cont [11/16] 0.0, 128
        %313 = vxpose.xlu0.b32.cont [12/16] 0.0, 128
        %314 = vxpose.xlu0.b32.cont [13/16] 0.0, 128
        %315 = vxpose.xlu0.b32.cont [14/16] 0.0, 128
        %316 = vxpose.xlu0.b32.cont [15/16] 0.0, 128
        %317 = vxpose.xlu0.b32.end [16/16] 0.0, 128
        %v318 = vpop.trf.xlu0
        %v319 = vpop.trf.xlu0
        %v320 = vpop.trf.xlu0
        %v321 = vpop.trf.xlu0
        %v322 = vpop.trf.xlu0
        %v323 = vpop.trf.xlu0
        %v324 = vpop.trf.xlu0
        %v325 = vpop.trf.xlu0
        %v326 = vpop.trf.xlu0
        %v327 = vpop.trf.xlu0
        %v328 = vpop.trf.xlu0
        %v329 = vpop.trf.xlu0
        %v330 = vpop.trf.xlu0
        %v331 = vpop.trf.xlu0
        %v332 = vpop.trf.xlu0
        %v333 = vpop.trf.xlu0
        %334 = vrot.lane.b32.xlu0 %v296, 64
        %v335 = vpop.permute.xlu0 %334
        %vm337 = vcmask 64512
        %v339 = vsel %vm337, %v318, 0
        %v342 = vsel %vm337, %v319, 0
        %v345 = vsel %vm337, %v320, 0
        %v348 = vsel %vm337, %v321, 0
        %350 = vmatpush.msra.mxu0 0.0
        %351 = vmatpush.msra.mxu0 0.0
        %352 = vmatpush.msra.mxu0 0.0
        %353 = vmatpush.msra.mxu0 0.0
        %354 = vmatpush.msra.mxu0 0.0
        %355 = vmatpush.msra.mxu0 0.0
        %356 = vmatpush.msra.mxu0 0.0
        %357 = vmatpush.msra.mxu0 0.0
        %358 = vmatpush.msra.mxu0 0.0
        %359 = vmatpush.msra.mxu0 0.0
        %360 = vmatpush.msra.mxu0 0.0
        %361 = vmatpush.msra.mxu0 0.0
        %362 = vmatpush.msra.mxu0 0.0
        %363 = vmatpush.msra.mxu0 0.0
        %364 = vmatpush.msra.mxu0 0.0
        %365 = vmatpush.msra.mxu0 %v335
        %366 = vmatmul.f32.gmra.mxu0 %v339
        %v367 = vpop.f32.mrf.mxu0
        %v368 = vadd.f32 0.0, %v367
        %369 = vmatmul.f32.gmra.mxu0 %v342
        %v370 = vpop.f32.mrf.mxu0
        %v371 = vadd.f32 0.0, %v370
        %372 = vmatmul.f32.gmra.mxu0 %v345
        %v373 = vpop.f32.mrf.mxu0
        %v374 = vadd.f32 0.0, %v373
        %375 = vmatmul.f32.gmra.mxu0 %v348
        %v376 = vpop.f32.mrf.mxu0
        %v377 = vadd.f32 0.0, %v376
        %378 = vdwg.mxu0
        %v379 = vmul.f32 %v368, %v266
        %v380 = vmul.f32 %v371, %v267
        %v381 = vmul.f32 %v374, %v268
        %v382 = vmul.f32 %v377, %v269
        %v383 = vsel %vm274, %v296, 0
        %385 = vmatpush.msra.mxu0 0.0
        %386 = vmatpush.msra.mxu0 0.0
        %387 = vmatpush.msra.mxu0 0.0
        %388 = vmatpush.msra.mxu0 0.0
        %389 = vmatpush.msra.mxu0 0.0
        %390 = vmatpush.msra.mxu0 0.0
        %391 = vmatpush.msra.mxu0 0.0
        %392 = vmatpush.msra.mxu0 0.0
        %393 = vmatpush.msra.mxu0 0.0
        %394 = vmatpush.msra.mxu0 0.0
        %395 = vmatpush.msra.mxu0 0.0
        %396 = vmatpush.msra.mxu0 0.0
        %397 = vmatpush.msra.mxu0 %v382
        %398 = vmatpush.msra.mxu0 %v381
        %399 = vmatpush.msra.mxu0 %v380
        %400 = vmatpush.msra.mxu0 %v379
        %401 = vmatmul.f32.gmra.mxu0 %v383
        %v402 = vpop.f32.mrf.mxu0
        %v403 = vadd.f32 0.0, %v402
        %404 = vdwg.mxu0
        %405 = vst.msk [vmem:[#allocation2] sm:$0xff] %vm274, %v403
        %v406 = vld [vmem:[#allocation2] sm:$0xff]
        %v407 = vld [vmem:[#allocation8] sm:$0xff]
        %v408 = vld [vmem:[#allocation8 + $0x8] sm:$0xff]
        %v409 = vld [vmem:[#allocation8 + $0x10] sm:$0xff]
        %v410 = vld [vmem:[#allocation8 + $0x18] sm:$0xff]
        %v412 = vsel %vm274, %v406, 0
        %414 = vmatpush.msra.mxu0 0.0
        %415 = vmatpush.msra.mxu0 0.0
        %416 = vmatpush.msra.mxu0 0.0
        %417 = vmatpush.msra.mxu0 0.0
        %418 = vmatpush.msra.mxu0 0.0
        %419 = vmatpush.msra.mxu0 0.0
        %420 = vmatpush.msra.mxu0 0.0
        %421 = vmatpush.msra.mxu0 0.0
        %422 = vmatpush.msra.mxu0 0.0
        %423 = vmatpush.msra.mxu0 0.0
        %424 = vmatpush.msra.mxu0 0.0
        %425 = vmatpush.msra.mxu0 0.0
        %426 = vmatpush.msra.mxu0 %v410
        %427 = vmatpush.msra.mxu0 %v409
        %428 = vmatpush.msra.mxu0 %v408
        %429 = vmatpush.msra.mxu0 %v407
        %430 = vmatmul.f32.gmra.mxu0 %v412
        %v431 = vpop.f32.mrf.mxu0
        %v432 = vadd.f32 0.0, %v431
        %433 = vdwg.mxu0
        %434 = vst.msk [vmem:[%s264] sm:$0xff] %vm274, %v432
        %s435 = sand.u32 %s120, 1
        %s436 = scalar_lea.sflag [#allocation5], %s435
        %s437 = sand.u32 %s120, 1
        %s438 = smul.addr %s437, 8
        %s439 = scalar_lea.vmem [#allocation11], %s438
        // Predicated region
        $region53: #{_mha_jit.1} parent=35 // pred_check
          %p440 = pneg %p130
        $region54: #{_mha_jit.1} parent=35 // pred_check_branch
          %442 = sbr.rel (%p440) target = $region56
        $region55: #{_mha_jit.1} parent=35 // pred_region
          %444 = vsyncadd %s436, 0
          %s445 = smul.addr %s23, 8
          %s446 = scalar_lea.hbm %s4, %s445
          %s448 = sshll.u32 %s439, 4
          %s449 = int_to_ptr.vmem [resolvable:$true] %s448
          %s450 = sshll.u32 %s446, 4
          %s451 = int_to_ptr.hbm [resolvable:$true] %s450
          %453 = dma.vmem_to_hbm [thread:$0]  %s449, 128, %s451, %s436
        $region56: #{_mha_jit.1} parent=35 // pred_fallthru
          _
      $region36: #{_mha_jit.1} parent=5 // pred_fallthru
        _
      %p454 = scmp.le.s32.totalorder 2, %s18
      // Predicated region
      $region57: #{_mha_jit.1} parent=5 // pred_check
        %p455 = pneg %p454
      $region58: #{_mha_jit.1} parent=5 // pred_check_branch
        %457 = sbr.rel (%p455) target = $region60
      $region59: #{_mha_jit.1} parent=5 // pred_region
        %s458 = ssub.s32 %s18, 2
        // Predicated region
        $region61: #{_mha_jit.1} parent=59 // pred_check
          %p459 = pneg %p136
        $region62: #{_mha_jit.1} parent=59 // pred_check_branch
          %461 = sbr.rel (%p459) target = $region64
        $region63: #{_mha_jit.1} parent=59 // pred_region
          %s462 = sand.u32 %s121, 1
          %s463 = scalar_lea.sflag [#allocation5], %s462
          %s464 = sand.u32 %s121, 1
          %s465 = smul.addr %s464, 8
          %s466 = scalar_lea.vmem [#allocation11], %s465
          %468 = dma.done %s463, 128
        $region64: #{_mha_jit.1} parent=59 // pred_fallthru
          _
      $region60: #{_mha_jit.1} parent=5 // pred_fallthru
        _
    $region6: #{_mha_jit.1} parent=1 // loop_footer
      %s22 = sadd.s32 1, %s18
    $region7: #{_mha_jit.1} parent=1 // loop_footer_branch
      %17 = sbr.rel target = $region3
    $region8: #{_mha_jit.1} parent=1 // loop_exit
      _
    %469 = vsyncpa [#allocation4], 1
    %s470 = scalar_lea.sflag [#allocation4], 1
    %471 = vsyncpa %s470, 1
    %472 = vsyncpa [#allocation7], 1
    %473 = vsyncpa [#allocation10], 1
    %474 = vsyncpa [#allocation5], 1
    %s475 = scalar_lea.sflag [#allocation5], 1
    %476 = vsyncpa %s475, 1

</llo_original>
